<compile_context>
chip_gen: v7x
topology: tpu7x:2x2x1
jax: 0.10.0
libtpu: 0.0.40
codegen_flags: <defaults>
</compile_context>

<pallas_src>
import jax
import jax.numpy as jnp
from jax.experimental import pallas as pl
from jax.experimental.pallas import tpu as pltpu

EPS = 1e-08
LANE = 128
VMEM_LIMIT = 32 * 1024 * 1024  # explicit scoped-VMEM budget (fits v5e/v6e/v7x)


def _round_up(x, m):
    return ((x + m - 1) // m) * m


def _cdiv(a, b):
    return (a + b - 1) // b


def _sublane_multiple(dt):
    # f32 -> 8, bf16/f16 -> 16, int8/fp8 -> 32 sublane packing.
    return max(8, 32 // jnp.dtype(dt).itemsize)


def _num_tensorcores_per_chip():
    # v7x has 2 TensorCores per chip; v5e/v6e have 1.  Only used to decide
    # whether to shard the reduction grid across cores.
    try:
        kind = jax.devices()[0].device_kind.lower()
    except Exception:
        return 1
    return 2 if "v7" in kind else 1


def _make_reduce_kernel(eps, nb, nb_half, trows, valid_last_rows, needs_mask):
    def kernel(p_ref, n_ref, k_ref, out_ref, acc_ref):
        c = pl.program_id(0)   # 'parallel' (TensorCore) split
        i = pl.program_id(1)   # 'arbitrary' (reduction) axis

        @pl.when(i == 0)
        def _init():
            acc_ref[...] = jnp.zeros_like(acc_ref)

        p = p_ref[...].astype(jnp.float32)
        n = n_ref[...].astype(jnp.float32)
        k_s = k_ref[...].astype(jnp.float32)
        k_f = n - k_s
        # Accumulate the (positive) log-likelihood; negate once at the end.
        ll = k_s * jnp.log(p + eps) + k_f * jnp.log(1.0 - p + eps)

        if needs_mask:
            # Only the globally-last block has Pallas row padding
            # (uninitialized VMEM rows); keep the iota/where off the hot path.
            is_edge = (c * nb_half + i) == (nb - 1)

            @pl.when(jnp.logical_not(is_edge))
            def _hot():
                acc_ref[...] += ll

            @pl.when(is_edge)
            def _edge():
                row = jax.lax.broadcasted_iota(jnp.int32, (trows, LANE), 0)
                acc_ref[...] += jnp.where(row < valid_last_rows, ll, 0.0)
        else:
            acc_ref[...] += ll

        @pl.when(i == pl.num_programs(1) - 1)
        def _fin():
            # One cross-lane reduce per core, only on the last step.
            s = -jnp.sum(acc_ref[...])
            out_ref[...] = jnp.broadcast_to(s, out_ref.shape).astype(out_ref.dtype)

    return kernel


def _make_elementwise_kernel(eps):
    def kernel(p_ref, n_ref, k_ref, out_ref):
        p = p_ref[...].astype(jnp.float32)
        n = n_ref[...].astype(jnp.float32)
        k_s = k_ref[...].astype(jnp.float32)
        k_f = n - k_s
        nll = -(k_s * jnp.log(p + eps) + k_f * jnp.log(1.0 - p + eps))
        # NOTE: rows beyond the valid extent of a partial last tile may hold
        # garbage (benign: Pallas only writes back the valid region).
        out_ref[...] = nll.astype(out_ref.dtype)

    return kernel


def binomial_nll_loss(p, n, k_s, eps=EPS, reduction="mean"):
    """Pallas TPU implementation of BinomialNLLLoss.forward."""
    assert p.shape == n.shape == k_s.shape
    orig_shape = p.shape
    total = int(p.size)
    out_dtype = jnp.result_type(p.dtype, n.dtype, k_s.dtype)

    # Flatten to a lane-dense (rows, 128) slab; zero-pad only if the element
    # count is not lane-aligned (pad values contribute exactly 0 to the sum).
    flat_p = p.reshape(-1)
    flat_n = n.reshape(-1)
    flat_k = k_s.reshape(-1)
    pad = (-total) % LANE
    if pad:
        flat_p = jnp.pad(flat_p, (0, pad))
        flat_n = jnp.pad(flat_n, (0, pad))
        flat_k = jnp.pad(flat_k, (0, pad))
    rows = (total + pad) // LANE
    p2 = flat_p.reshape(rows, LANE)
    n2 = flat_n.reshape(rows, LANE)
    k2 = flat_k.reshape(rows, LANE)

    # Sublane packing requirement across all dtypes involved.
    sub = max(
        _sublane_multiple(out_dtype),
        *[_sublane_multiple(x.dtype) for x in (p, n, k_s)],
    )
    max_item = max(x.dtype.itemsize for x in (p, n, k_s))

    # Row-tile cap: ~1 MiB per (largest-dtype) input buffer; multiple of sub.
    trows_cap = (1 << 20) // (LANE * max_item)
    trows_cap = max(sub, (trows_cap // sub) * sub)

    if rows <= trows_cap:
        trows, nb = rows, 1          # single full-extent block: always legal
    else:
        trows, nb = trows_cap, _cdiv(rows, trows_cap)

    in_bytes = (p.dtype.itemsize + n.dtype.itemsize + k_s.dtype.itemsize) * total

    if reduction in ("mean", "sum"):
        # Shard the reduction across TensorCores only where there are 2 TCs
        # (v7x).  Never DMA a duplicated block: require an even block count,
        # shrinking the tile slightly if needed.
        num_splits = 1
        if _num_tensorcores_per_chip() >= 2 and nb >= 2:
            if nb % 2 == 0:
                num_splits = 2
            else:
                t2 = _round_up(_cdiv(rows, nb + 1), sub)
                if 0 < t2 <= trows_cap and _cdiv(rows, t2) % 2 == 0:
                    trows, nb, num_splits = t2, _cdiv(rows, t2), 2
        nb_half = nb // num_splits

        valid_last_rows = rows - (nb - 1) * trows
        needs_mask = valid_last_rows != trows   # static

        kernel = _make_reduce_kernel(eps, nb, nb_half, trows,
                                     valid_last_rows, needs_mask)

        def in_map(c, i):
            return (c * nb_half + i, 0)

        partials = pl.pallas_call(
            kernel,
            out_shape=jax.ShapeDtypeStruct((num_splits, 8, LANE), jnp.float32),
            grid_spec=pltpu.PrefetchScalarGridSpec(
                num_scalar_prefetch=0,
                grid=(num_splits, nb_half),
                in_specs=[
                    pl.BlockSpec((trows, LANE), in_map),
                    pl.BlockSpec((trows, LANE), in_map),
                    pl.BlockSpec((trows, LANE), in_map),
                ],
                out_specs=pl.BlockSpec((1, 8, LANE), lambda c, i: (c, 0, 0)),
                scratch_shapes=[pltpu.VMEM((trows, LANE), jnp.float32)],
            ),
            compiler_params=pltpu.CompilerParams(
                dimension_semantics=("parallel", "arbitrary"),
                vmem_limit_bytes=VMEM_LIMIT,
            ),
            cost_estimate=pl.CostEstimate(
                flops=5 * total,
                transcendentals=2 * total,
                bytes_accessed=in_bytes,
            ),
        )(p2, n2, k2)

        s = jnp.sum(partials[:, 0, 0])
        if reduction == "mean":
            return s / jnp.float32(total)
        return s

    else:  # reduction == 'none'
        kernel = _make_elementwise_kernel(eps)
        out = pl.pallas_call(
            kernel,
            out_shape=jax.ShapeDtypeStruct((rows, LANE), out_dtype),
            grid_spec=pltpu.PrefetchScalarGridSpec(
                num_scalar_prefetch=0,
                grid=(nb,),
                in_specs=[
                    pl.BlockSpec((trows, LANE), lambda i: (i, 0)),
                    pl.BlockSpec((trows, LANE), lambda i: (i, 0)),
                    pl.BlockSpec((trows, LANE), lambda i: (i, 0)),
                ],
                out_specs=pl.BlockSpec((trows, LANE), lambda i: (i, 0)),
            ),
            compiler_params=pltpu.CompilerParams(
                dimension_semantics=("parallel",),
                vmem_limit_bytes=VMEM_LIMIT,
            ),
            cost_estimate=pl.CostEstimate(
                flops=5 * total,
                transcendentals=2 * total,
                bytes_accessed=in_bytes + jnp.dtype(out_dtype).itemsize * total,
            ),
        )(p2, n2, k2)
        if pad:
            return out.reshape(-1)[:total].reshape(orig_shape)
        return out.reshape(orig_shape)


def _reference(p, n, k_s, eps=EPS, reduction="mean"):
    k_f = n - k_s
    nll = -1.0 * (k_s * jnp.log(p + eps) + k_f * jnp.log(1.0 - p + eps))
    if reduction == "mean":
        return nll.mean()
    elif reduction == "sum":
        return nll.sum()
    return nll


if __name__ == "__main__":
    key = jax.random.PRNGKey(0)

    shapes = [
        (2, 4, 16, 16),   # primary NCHW test (lane-aligned, single block)
        (2, 3, 17, 19),   # ragged element count -> exercises lane padding
        (4, 8, 96, 96),   # multi-block grid -> exercises edge-block masking
    ]

    for shape in shapes:
        key, kp, kn, kk = jax.random.split(key, 4)
        # p: probabilities in (0,1); n: trial counts; k_s: successes <= n
        p = jax.random.uniform(kp, shape, jnp.float32, minval=0.05, maxval=0.95)
        n = jnp.floor(jax.random.uniform(kn, shape, jnp.float32, minval=1.0, maxval=10.0))
        k_s = jnp.floor(jax.random.uniform(kk, shape, jnp.float32) * (n + 1.0))

        for red in ("mean", "sum", "none"):
            out = jax.block_until_ready(binomial_nll_loss(p, n, k_s, reduction=red))
            ref = jax.block_until_ready(_reference(p, n, k_s, reduction=red))
            assert jnp.allclose(out, ref, rtol=1e-5, atol=1e-5), (shape, red)

    print("KERNEL_OK")
</pallas_src>

<mosaic_0001>
module attributes {stable_mosaic.version = 11 : i64} {
  func.func @kernel(%arg0: i32, %arg1: i32, %arg2: memref<16x128xf32, #tpu.memory_space<vmem>>, %arg3: memref<16x128xf32, #tpu.memory_space<vmem>>, %arg4: memref<16x128xf32, #tpu.memory_space<vmem>>, %arg5: memref<1x8x128xf32, #tpu.memory_space<vmem>>, %arg6: memref<16x128xf32, #tpu.memory_space<vmem>>) attributes {dimension_semantics = [#tpu.dimension_semantics<parallel>, #tpu.dimension_semantics<arbitrary>], iteration_bounds = array<i64: 1, 1>, scalar_prefetch = 0 : i64, scratch_operands = 1 : i64, tpu.core_type = #tpu.core_type<tc>, window_params = [{transform_indices = @transform_0, window_bounds = array<i64: 16, 128>}, {transform_indices = @transform_1, window_bounds = array<i64: 16, 128>}, {transform_indices = @transform_2, window_bounds = array<i64: 16, 128>}, {transform_indices = @transform_3, window_bounds = array<i64: 1, 8, 128>}]} {
    %c0_i32 = arith.constant 0 : i32
    %0 = arith.cmpi eq, %arg1, %c0_i32 : i32
    %1 = arith.extui %0 : i1 to i32
    %c0_i32_0 = arith.constant 0 : i32
    %2 = arith.cmpi ne, %1, %c0_i32_0 : i32
    scf.if %2 {
      %cst_14 = arith.constant 0.000000e+00 : f32
      %24 = vector.broadcast %cst_14 : f32 to vector<16x128xf32>
      %c0_15 = arith.constant 0 : index
      %c0_16 = arith.constant 0 : index
      %25 = vector.load %arg6[%c0_15, %c0_16] : memref<16x128xf32, #tpu.memory_space<vmem>>, vector<16x128xf32>
      tpu.vector_store %arg6[%c0_15, %c0_16], %24 {strides = array<i32>} : memref<16x128xf32, #tpu.memory_space<vmem>>, vector<16x128xf32>,
    } else {
    }
    %c0 = arith.constant 0 : index
    %c0_1 = arith.constant 0 : index
    %3 = vector.load %arg2[%c0, %c0_1] : memref<16x128xf32, #tpu.memory_space<vmem>>, vector<16x128xf32>
    %c0_2 = arith.constant 0 : index
    %c0_3 = arith.constant 0 : index
    %4 = vector.load %arg3[%c0_2, %c0_3] : memref<16x128xf32, #tpu.memory_space<vmem>>, vector<16x128xf32>
    %c0_4 = arith.constant 0 : index
    %c0_5 = arith.constant 0 : index
    %5 = vector.load %arg4[%c0_4, %c0_5] : memref<16x128xf32, #tpu.memory_space<vmem>>, vector<16x128xf32>
    %6 = arith.subf %4, %5 : vector<16x128xf32>
    %cst = arith.constant 9.99999993E-9 : f32
    %7 = vector.broadcast %cst : f32 to vector<16x128xf32>
    %8 = arith.addf %3, %7 : vector<16x128xf32>
    %9 = math.log %8 : vector<16x128xf32>
    %10 = arith.mulf %5, %9 : vector<16x128xf32>
    %cst_6 = arith.constant 1.000000e+00 : f32
    %11 = vector.broadcast %cst_6 : f32 to vector<16x128xf32>
    %12 = arith.subf %11, %3 : vector<16x128xf32>
    %cst_7 = arith.constant 9.99999993E-9 : f32
    %13 = vector.broadcast %cst_7 : f32 to vector<16x128xf32>
    %14 = arith.addf %12, %13 : vector<16x128xf32>
    %15 = math.log %14 : vector<16x128xf32>
    %16 = arith.mulf %6, %15 : vector<16x128xf32>
    %17 = arith.addf %10, %16 : vector<16x128xf32>
    %c0_8 = arith.constant 0 : index
    %c0_9 = arith.constant 0 : index
    %18 = vector.load %arg6[%c0_8, %c0_9] : memref<16x128xf32, #tpu.memory_space<vmem>>, vector<16x128xf32>
    %19 = arith.addf %18, %17 : vector<16x128xf32>
    %c0_10 = arith.constant 0 : index
    %c0_11 = arith.constant 0 : index
    %20 = vector.load %arg6[%c0_10, %c0_11] : memref<16x128xf32, #tpu.memory_space<vmem>>, vector<16x128xf32>
    tpu.vector_store %arg6[%c0_10, %c0_11], %19 {strides = array<i32>} : memref<16x128xf32, #tpu.memory_space<vmem>>, vector<16x128xf32>,
    %c0_i32_12 = arith.constant 0 : i32
    %21 = arith.cmpi eq, %arg1, %c0_i32_12 : i32
    %22 = arith.extui %21 : i1 to i32
    %c0_i32_13 = arith.constant 0 : i32
    %23 = arith.cmpi ne, %22, %c0_i32_13 : i32
    scf.if %23 {
      %c0_14 = arith.constant 0 : index
      %c0_15 = arith.constant 0 : index
      %24 = vector.load %arg6[%c0_14, %c0_15] : memref<16x128xf32, #tpu.memory_space<vmem>>, vector<16x128xf32>
      %25 = vector.shape_cast %24 : vector<16x128xf32> to vector<1x16x128xf32>
      %cst_16 = arith.constant dense<0.000000e+00> : vector<1xf32>
      %26 = vector.multi_reduction <add>, %25, %cst_16 [1, 2] : vector<1x16x128xf32> to vector<1xf32>
      %27 = vector.shape_cast %26 : vector<1xf32> to vector<1x1x1xf32>
      %28 = vector.extract %27[0, 0, 0] : f32 from vector<1x1x1xf32>
      %cst_17 = arith.constant 0.000000e+00 : f32
      %29 = arith.subf %cst_17, %28 : f32
      %30 = vector.broadcast %29 : f32 to vector<1x8x128xf32>
      %c0_18 = arith.constant 0 : index
      %c0_19 = arith.constant 0 : index
      %c0_20 = arith.constant 0 : index
      %31 = vector.load %arg5[%c0_18, %c0_19, %c0_20] : memref<1x8x128xf32, #tpu.memory_space<vmem>>, vector<1x8x128xf32>
      tpu.vector_store %arg5[%c0_18, %c0_19, %c0_20], %30 {strides = array<i32>} : memref<1x8x128xf32, #tpu.memory_space<vmem>>, vector<1x8x128xf32>,
    } else {
    }
    return
  }
  func.func @transform_0(%arg0: i32, %arg1: i32) -> (i32, i32) {
    %c1_i32 = arith.constant 1 : i32
    %0 = arith.muli %arg0, %c1_i32 : i32
    %1 = arith.addi %0, %arg1 : i32
    %c0_i32 = arith.constant 0 : i32
    %c0_i32_0 = arith.constant 0 : i32
    return %1, %c0_i32 : i32, i32
  }
  func.func @transform_1(%arg0: i32, %arg1: i32) -> (i32, i32) {
    %c1_i32 = arith.constant 1 : i32
    %0 = arith.muli %arg0, %c1_i32 : i32
    %1 = arith.addi %0, %arg1 : i32
    %c0_i32 = arith.constant 0 : i32
    %c0_i32_0 = arith.constant 0 : i32
    return %1, %c0_i32 : i32, i32
  }
  func.func @transform_2(%arg0: i32, %arg1: i32) -> (i32, i32) {
    %c1_i32 = arith.constant 1 : i32
    %0 = arith.muli %arg0, %c1_i32 : i32
    %1 = arith.addi %0, %arg1 : i32
    %c0_i32 = arith.constant 0 : i32
    %c0_i32_0 = arith.constant 0 : i32
    return %1, %c0_i32 : i32, i32
  }
  func.func @transform_3(%arg0: i32, %arg1: i32) -> (i32, i32, i32) {
    %c0_i32 = arith.constant 0 : i32
    %c0_i32_0 = arith.constant 0 : i32
    %c0_i32_1 = arith.constant 0 : i32
    return %arg0, %c0_i32, %c0_i32_0 : i32, i32, i32
  }
}

</mosaic_0001>

<llo_original>
// kernel: tpu_custom_call.1
$region0: #{tpu_custom_call.1}
  #allocation0 [shape = 'u32[]', space=smem, size = 0x4, offset = 0x4, fixed_abs, tag = 'smem constant byte address 0x4 - core index']
  #allocation1 [shape = 'u32[144,128]{1,0:T(1,128)}', space=vmem, size = 0x12000, scoped, tag = 'internal scratch']
  #allocation2 [shape = 'f32[16,128]{1,0:T(8,128)}', space=vmem, size = 0x2000, scoped, tag = 'scratch operand']
  %s0 = inlined_call_operand.hbm [shape: f32[16,128], index: 0, kind: input, shape index: {}]
  %s1 = inlined_call_operand.hbm [shape: f32[16,128], index: 1, kind: input, shape index: {}]
  %s2 = inlined_call_operand.hbm [shape: f32[16,128], index: 2, kind: input, shape index: {}]
  %s3 = inlined_call_operand.hbm [shape: f32[1,8,128], index: 3, kind: output, shape index: {}]
  %s4 = sld [smem:[#allocation0]]
  $region42: #{tpu_custom_call.1} parent=0
    _
  %s6 = ssub.s32 1, %s4
  %s7 = scalar_select 0, %s6, %s4
  $region1: #{tpu_custom_call.1} parent=0
    #allocation3 [shape = 'u8[8192]{0}', space=vmem, size = 0x2000, scoped, tag = 'input window, operand 0, single buffered']
    #allocation4 [shape = 's32[1]{0}', space=sflag, size = 0x4, scoped, tag = 'scoped memory for tpu_custom_call.1']
    #allocation5 [shape = 's32[1]{0}', space=sflag, size = 0x4, scoped, tag = 'scoped memory for tpu_custom_call.1']
    #allocation6 [shape = 'u8[8192]{0}', space=vmem, size = 0x2000, scoped, tag = 'input window, operand 1, single buffered']
    #allocation7 [shape = 's32[1]{0}', space=sflag, size = 0x4, scoped, tag = 'scoped memory for tpu_custom_call.1']
    #allocation8 [shape = 'u8[8192]{0}', space=vmem, size = 0x2000, scoped, tag = 'input window, operand 2, single buffered']
    #allocation9 [shape = 'u8[4096]{0}', space=vmem, size = 0x1000, scoped, tag = 'output window, operand 0, single buffered']
    %8 = vsyncpa [#allocation4], 0
    %9 = vsyncpa [#allocation7], 0
    %10 = vsyncpa [#allocation5], 0
    // Predicated region
    $region2: #{tpu_custom_call.1} parent=1 // pred_check
      _
    $region3: #{tpu_custom_call.1} parent=1 // pred_check_branch
      %12 = sbr.rel (0) target = $region5
    $region4: #{tpu_custom_call.1} parent=1 // pred_region
      %s13 = sadd.s32 0, 0
      %s14 = smul.u32 2, %s13
      %s16 = ssub.s32 256, 256
      %17 = vsyncadd [#allocation4], %s16
      %s18 = smul.addr %s14, 128
      %s19 = scalar_lea.hbm %s0, %s18
      %s20 = sshll.u32 [#allocation3], 4
      %s21 = int_to_ptr.vmem [resolvable:$true] %s20
      %26 = dma.hbm_to_vmem [thread:$0]  %s19, 256, %s21, [#allocation4], 128, 128, 8
    $region5: #{tpu_custom_call.1} parent=1 // pred_fallthru
      _
    // Predicated region
    $region6: #{tpu_custom_call.1} parent=1 // pred_check
      _
    $region7: #{tpu_custom_call.1} parent=1 // pred_check_branch
      %28 = sbr.rel (0) target = $region9
    $region8: #{tpu_custom_call.1} parent=1 // pred_region
      %s29 = sadd.s32 0, 0
      %s30 = smul.u32 2, %s29
      %s32 = ssub.s32 256, 256
      %33 = vsyncadd [#allocation7], %s32
      %s34 = smul.addr %s30, 128
      %s35 = scalar_lea.hbm %s1, %s34
      %s36 = sshll.u32 [#allocation6], 4
      %s37 = int_to_ptr.vmem [resolvable:$true] %s36
      %42 = dma.hbm_to_vmem [thread:$0]  %s35, 256, %s37, [#allocation7], 128, 128, 8
    $region9: #{tpu_custom_call.1} parent=1 // pred_fallthru
      _
    // Predicated region
    $region10: #{tpu_custom_call.1} parent=1 // pred_check
      _
    $region11: #{tpu_custom_call.1} parent=1 // pred_check_branch
      %44 = sbr.rel (0) target = $region13
    $region12: #{tpu_custom_call.1} parent=1 // pred_region
      %s45 = sadd.s32 0, 0
      %s46 = smul.u32 2, %s45
      %s48 = ssub.s32 256, 256
      %49 = vsyncadd [#allocation7], %s48
      %s50 = smul.addr %s46, 128
      %s51 = scalar_lea.hbm %s2, %s50
      %s52 = sshll.u32 [#allocation8], 4
      %s53 = int_to_ptr.vmem [resolvable:$true] %s52
      %58 = dma.hbm_to_vmem [thread:$0]  %s51, 256, %s53, [#allocation7], 128, 128, 8
    $region13: #{tpu_custom_call.1} parent=1 // pred_fallthru
      _
    // Predicated region
    $region14: #{tpu_custom_call.1} parent=1 // pred_check
      _
    $region15: #{tpu_custom_call.1} parent=1 // pred_check_branch
      %60 = sbr.rel (0) target = $region17
    $region16: #{tpu_custom_call.1} parent=1 // pred_region
      %61 = dma.done [#allocation4], 256
    $region17: #{tpu_custom_call.1} parent=1 // pred_fallthru
      _
    // Predicated region
    $region18: #{tpu_custom_call.1} parent=1 // pred_check
      _
    $region19: #{tpu_custom_call.1} parent=1 // pred_check_branch
      %63 = sbr.rel (0) target = $region21
    $region20: #{tpu_custom_call.1} parent=1 // pred_region
      %64 = dma.done [#allocation7], 256
    $region21: #{tpu_custom_call.1} parent=1 // pred_fallthru
      _
    // Predicated region
    $region22: #{tpu_custom_call.1} parent=1 // pred_check
      _
    $region23: #{tpu_custom_call.1} parent=1 // pred_check_branch
      %66 = sbr.rel (0) target = $region25
    $region24: #{tpu_custom_call.1} parent=1 // pred_region
      %67 = dma.done [#allocation7], 256
    $region25: #{tpu_custom_call.1} parent=1 // pred_fallthru
      _
    %s68 = sadd.s32 0, 0
    %s69 = smul.u32 2, %s68
    %s70 = sadd.s32 0, 0
    %s71 = smul.u32 2, %s70
    %s72 = sadd.s32 0, 0
    %s73 = smul.u32 2, %s72
    %p74 = scmp.eq.s32.totalorder 0, 0
    // Predicated region
    $region26: #{tpu_custom_call.1} parent=1 // pred_check
      %p75 = pneg %p74
    $region27: #{tpu_custom_call.1} parent=1 // pred_check_branch
      %77 = sbr.rel (%p75) target = $region29
    $region28: #{tpu_custom_call.1} parent=1 // pred_region
      %78 = vst [vmem:[#allocation2] sm:$0xff] 0.0
      %79 = vst [vmem:[#allocation2 + $0x8] sm:$0xff] 0.0
    $region29: #{tpu_custom_call.1} parent=1 // pred_fallthru
      _
    %v80 = vld [vmem:[#allocation3] sm:$0xff]
    %v81 = vld [vmem:[#allocation3 + $0x8] sm:$0xff]
    %v82 = vld [vmem:[#allocation6] sm:$0xff]
    %v83 = vld [vmem:[#allocation6 + $0x8] sm:$0xff]
    %v84 = vld [vmem:[#allocation8] sm:$0xff]
    %v85 = vld [vmem:[#allocation8 + $0x8] sm:$0xff]
    %v86 = vsub.f32 %v82, %v84
    %v87 = vsub.f32 %v83, %v85
    %v88 = vadd.f32 %v80, 1e-08
    %v89 = vadd.f32 %v81, 1e-08
    %v90 = vlog2.pop %v88
    %v91 = vmul.f32 %v90, 0.6931472
    %v92 = vlog2.pop %v89
    %v93 = vmul.f32 %v92, 0.6931472
    %v94 = vmul.f32 %v84, %v91
    %v95 = vmul.f32 %v85, %v93
    %v96 = vsub.f32 1.0, %v80
    %v97 = vsub.f32 1.0, %v81
    %v98 = vadd.f32 %v96, 1e-08
    %v99 = vadd.f32 %v97, 1e-08
    %v100 = vlog2.pop %v98
    %v101 = vmul.f32 %v100, 0.6931472
    %v102 = vlog2.pop %v99
    %v103 = vmul.f32 %v102, 0.6931472
    %v104 = vmul.f32 %v86, %v101
    %v105 = vmul.f32 %v87, %v103
    %v106 = vadd.f32 %v94, %v104
    %v107 = vadd.f32 %v95, %v105
    %v108 = vld [vmem:[#allocation2] sm:$0xff]
    %v109 = vld [vmem:[#allocation2 + $0x8] sm:$0xff]
    %v110 = vadd.f32 %v108, %v106
    %v111 = vadd.f32 %v109, %v107
    %112 = vst [vmem:[#allocation2] sm:$0xff] %v110
    %113 = vst [vmem:[#allocation2 + $0x8] sm:$0xff] %v111
    // Predicated region
    $region30: #{tpu_custom_call.1} parent=1 // pred_check
      %p114 = pneg %p74
    $region31: #{tpu_custom_call.1} parent=1 // pred_check_branch
      %116 = sbr.rel (%p114) target = $region33
    $region32: #{tpu_custom_call.1} parent=1 // pred_region
      %v117 = vld [vmem:[#allocation2] sm:$0xff]
      %v118 = vld [vmem:[#allocation2 + $0x8] sm:$0xff]
      %v119 = vadd.f32 %v117, %v118
      %120 = vadd.xlane.f32.xlu0 %v119
      %v121 = vpop.xlane.xlu0 %120
      %v122 = vrot.slane %v121, 4
      %v123 = vadd.f32 %v121, %v122
      %v124 = vrot.slane %v123, 2
      %v125 = vadd.f32 %v123, %v124
      %v126 = vrot.slane %v125, 1
      %v127 = vadd.f32 %v125, %v126
      %s128 = vtos %v127
      %s129 = ssub.f32 0.0, %s128
      %v130 = vstv %s129
      %131 = vst [vmem:[#allocation9] sm:$0xff] %v130
    $region33: #{tpu_custom_call.1} parent=1 // pred_fallthru
      _
    // Predicated region
    $region34: #{tpu_custom_call.1} parent=1 // pred_check
      _
    $region35: #{tpu_custom_call.1} parent=1 // pred_check_branch
      %133 = sbr.rel (0) target = $region37
    $region36: #{tpu_custom_call.1} parent=1 // pred_region
      %s135 = ssub.s32 128, 128
      %136 = vsyncadd [#allocation5], %s135
      %s138 = sshll.u32 [#allocation9], 4
      %s139 = int_to_ptr.vmem [resolvable:$true] %s138
      %141 = dma.vmem_to_hbm [thread:$0]  %s139, 128, %s3, [#allocation5]
    $region37: #{tpu_custom_call.1} parent=1 // pred_fallthru
      _
    // Predicated region
    $region38: #{tpu_custom_call.1} parent=1 // pred_check
      _
    $region39: #{tpu_custom_call.1} parent=1 // pred_check_branch
      %143 = sbr.rel (0) target = $region41
    $region40: #{tpu_custom_call.1} parent=1 // pred_region
      %144 = dma.done [#allocation5], 128
    $region41: #{tpu_custom_call.1} parent=1 // pred_fallthru
      _
    %145 = vsyncpa [#allocation4], 1
    %146 = vsyncpa [#allocation7], 1
    %147 = vsyncpa [#allocation5], 1

</llo_original>
